<compile_context>
chip_gen: v7x
topology: tpu7x:2x2x1
jax: 0.10.0
libtpu: 0.0.40
codegen_flags: <defaults>
</compile_context>

<pallas_src>
import jax
import jax.numpy as jnp
from jax.experimental import pallas as pl
from jax.experimental.pallas import tpu as pltpu


# ----------------------------- kernel bodies -------------------------------- #

def _softmax_cols(x, w, b_smem):
    """x: (B, D) f32, w: (C=3, D) f32 PyTorch layout, b_smem: SMEM (3,) f32.
    Returns per-class probability columns p0, p1, p2, each (B, 1) f32.
    The (8,32)x(32,3) contraction stays on the VPU (3 broadcast-mul + lane reduces);
    far too small to pay MXU push/pop latency, and v5e-friendly."""
    l0 = jnp.sum(x * w[0:1, :], axis=-1, keepdims=True) + b_smem[0]   # (B, 1)
    l1 = jnp.sum(x * w[1:2, :], axis=-1, keepdims=True) + b_smem[1]   # (B, 1)
    l2 = jnp.sum(x * w[2:3, :], axis=-1, keepdims=True) + b_smem[2]   # (B, 1)
    m = jnp.maximum(jnp.maximum(l0, l1), l2)                          # elementwise, no XLU
    e0 = jnp.exp(l0 - m)
    e1 = jnp.exp(l1 - m)
    e2 = jnp.exp(l2 - m)
    s = e0 + e1 + e2
    # EUP approx reciprocal + one Newton step: ~1e-7 rel error, keeps 1e-5 tolerance.
    r = pl.reciprocal(s, approx=True)
    r = r * (2.0 - s * r)
    return e0 * r, e1 * r, e2 * r


def _infer_kernel(x_ref, w_ref, b_ref, probs_ref):
    p0, p1, p2 = _softmax_cols(x_ref[...], w_ref[...], b_ref)
    # Single output assembly at the very end (only remaining lane shuffle).
    probs_ref[...] = jnp.concatenate([p0, p1, p2], axis=-1)


def _train_kernel(x_ref, w_ref, b_ref, y_ref, loss_ref):
    # Fused: linear -> softmax -> CrossEntropyLoss(probs, y), mean reduction.
    p0, p1, p2 = _softmax_cols(x_ref[...], w_ref[...], b_ref)        # each (B, 1)
    B = p0.shape[0]
    # NOTE: logsumexp max-stabilization is skipped *only* because the inputs here are
    # softmax probabilities in (0, 1]; do not reuse this for raw logits.
    lse = jnp.log(jnp.exp(p0) + jnp.exp(p1) + jnp.exp(p2))           # (B, 1)
    y = y_ref[...]                                                   # (B, 1) int32
    picked = (jnp.where(y == 0, p0, 0.0)
              + jnp.where(y == 1, p1, 0.0)
              + jnp.where(y == 2, p2, 0.0))                          # (B, 1) = probs[i, y_i]
    nll = lse - picked                                               # (B, 1)
    loss_ref[0, 0] = jnp.sum(nll) * (1.0 / B)                        # mean -> SMEM scalar


# ----------------------------- wrapper --------------------------------------- #

def torch_model_forward(x, weight, bias, y=None):
    """x: (B, D) f32; weight: (3, D) f32 (PyTorch layout); bias: (3,) f32;
    y: optional (B, 1) int32 class indices — pre-shaped/cast at setup time so the hot
    path emits exactly one pallas_call and no reshape/convert HLO.
    Returns probs (B, 3) or the scalar mean CE loss."""
    B, D = x.shape
    C = weight.shape[0]
    vmem = pl.BlockSpec(memory_space=pltpu.MemorySpace.VMEM)
    smem = pl.BlockSpec(memory_space=pltpu.MemorySpace.SMEM)

    if y is None:
        return pl.pallas_call(
            _infer_kernel,
            out_shape=jax.ShapeDtypeStruct((B, C), jnp.float32),
            in_specs=[vmem, vmem, smem],
            out_specs=vmem,
        )(x, weight, bias)

    loss = pl.pallas_call(
        _train_kernel,
        out_shape=jax.ShapeDtypeStruct((1, 1), jnp.float32),
        in_specs=[vmem, vmem, smem, vmem],
        out_specs=smem,
    )(x, weight, bias, y)
    return loss[0, 0]


# ------------------------------- main ----------------------------------------- #

if __name__ == "__main__":
    key = jax.random.PRNGKey(0)
    k_x, k_w, k_b, k_y = jax.random.split(key, 4)

    batch = 8
    input_size = 32
    num_classes = 3

    # Deterministic inputs / parameters (mimic PyTorch Linear default init range).
    x = jax.random.normal(k_x, (batch, input_size), dtype=jnp.float32)
    bound = 1.0 / jnp.sqrt(input_size)
    weight = jax.random.uniform(k_w, (num_classes, input_size),
                                minval=-bound, maxval=bound, dtype=jnp.float32)
    bias = jax.random.uniform(k_b, (num_classes,),
                              minval=-bound, maxval=bound, dtype=jnp.float32)
    # Labels pre-shaped to (B, 1) int32 at setup time (kept out of the hot path).
    y = jax.random.randint(k_y, (batch,), 0, num_classes, dtype=jnp.int32)
    y_col = y.reshape(batch, 1).astype(jnp.int32)

    # Inference path: softmax(linear(x), dim=1)
    y_pred = torch_model_forward(x, weight, bias)
    y_pred = jax.block_until_ready(y_pred)

    # Training path: CrossEntropyLoss(softmax_probs, y), single fused kernel
    loss = torch_model_forward(x, weight, bias, y_col)
    loss = jax.block_until_ready(loss)

    # Sanity checks against a plain-JAX reference.
    logits_ref = x @ weight.T + bias
    probs_ref = jax.nn.softmax(logits_ref, axis=1)
    loss_ref = jnp.mean(
        -jnp.take_along_axis(jax.nn.log_softmax(probs_ref, axis=1),
                             y[:, None], axis=1)[:, 0])
    assert jnp.allclose(y_pred, probs_ref, atol=1e-5), "probs mismatch"
    assert jnp.allclose(loss, loss_ref, atol=1e-5), "loss mismatch"

    print("KERNEL_OK")
</pallas_src>

<mosaic_0001>
module attributes {stable_mosaic.version = 11 : i64} {
  func.func @_infer_kernel(%arg0: memref<8x32xf32, #tpu.memory_space<vmem>>, %arg1: memref<3x32xf32, #tpu.memory_space<vmem>>, %arg2: memref<3xf32, #tpu.memory_space<smem>>, %arg3: memref<8x3xf32, #tpu.memory_space<vmem>>) attributes {dimension_semantics = [], scalar_prefetch = 0 : i64, scratch_operands = 0 : i64, tpu.core_type = #tpu.core_type<tc>} {
    %c0 = arith.constant 0 : index
    %c0_0 = arith.constant 0 : index
    %0 = vector.load %arg0[%c0, %c0_0] : memref<8x32xf32, #tpu.memory_space<vmem>>, vector<8x32xf32>
    %c0_1 = arith.constant 0 : index
    %c0_2 = arith.constant 0 : index
    %1 = vector.load %arg1[%c0_1, %c0_2] : memref<3x32xf32, #tpu.memory_space<vmem>>, vector<3x32xf32>
    %2 = vector.extract_strided_slice %1 {offsets = [0, 0], sizes = [1, 32], strides = [1, 1]} : vector<3x32xf32> to vector<1x32xf32>
    %3 = vector.broadcast %2 : vector<1x32xf32> to vector<8x32xf32>
    %4 = arith.mulf %0, %3 : vector<8x32xf32>
    %cst = arith.constant dense<0.000000e+00> : vector<8xf32>
    %5 = vector.multi_reduction <add>, %4, %cst [1] : vector<8x32xf32> to vector<8xf32>
    %6 = vector.shape_cast %5 : vector<8xf32> to vector<8x1xf32>
    %c0_3 = arith.constant 0 : index
    %7 = memref.load %arg2[%c0_3] : memref<3xf32, #tpu.memory_space<smem>>
    %8 = vector.broadcast %7 : f32 to vector<8x1xf32>
    %9 = arith.addf %6, %8 : vector<8x1xf32>
    %10 = vector.extract_strided_slice %1 {offsets = [1, 0], sizes = [1, 32], strides = [1, 1]} : vector<3x32xf32> to vector<1x32xf32>
    %11 = vector.broadcast %10 : vector<1x32xf32> to vector<8x32xf32>
    %12 = arith.mulf %0, %11 : vector<8x32xf32>
    %cst_4 = arith.constant dense<0.000000e+00> : vector<8xf32>
    %13 = vector.multi_reduction <add>, %12, %cst_4 [1] : vector<8x32xf32> to vector<8xf32>
    %14 = vector.shape_cast %13 : vector<8xf32> to vector<8x1xf32>
    %c1 = arith.constant 1 : index
    %15 = memref.load %arg2[%c1] : memref<3xf32, #tpu.memory_space<smem>>
    %16 = vector.broadcast %15 : f32 to vector<8x1xf32>
    %17 = arith.addf %14, %16 : vector<8x1xf32>
    %18 = vector.extract_strided_slice %1 {offsets = [2, 0], sizes = [1, 32], strides = [1, 1]} : vector<3x32xf32> to vector<1x32xf32>
    %19 = vector.broadcast %18 : vector<1x32xf32> to vector<8x32xf32>
    %20 = arith.mulf %0, %19 : vector<8x32xf32>
    %cst_5 = arith.constant dense<0.000000e+00> : vector<8xf32>
    %21 = vector.multi_reduction <add>, %20, %cst_5 [1] : vector<8x32xf32> to vector<8xf32>
    %22 = vector.shape_cast %21 : vector<8xf32> to vector<8x1xf32>
    %c2 = arith.constant 2 : index
    %23 = memref.load %arg2[%c2] : memref<3xf32, #tpu.memory_space<smem>>
    %24 = vector.broadcast %23 : f32 to vector<8x1xf32>
    %25 = arith.addf %22, %24 : vector<8x1xf32>
    %26 = arith.maximumf %9, %17 : vector<8x1xf32>
    %27 = arith.maximumf %26, %25 : vector<8x1xf32>
    %28 = arith.subf %9, %27 : vector<8x1xf32>
    %29 = math.exp %28 : vector<8x1xf32>
    %30 = arith.subf %17, %27 : vector<8x1xf32>
    %31 = math.exp %30 : vector<8x1xf32>
    %32 = arith.subf %25, %27 : vector<8x1xf32>
    %33 = math.exp %32 : vector<8x1xf32>
    %34 = arith.addf %29, %31 : vector<8x1xf32>
    %35 = arith.addf %34, %33 : vector<8x1xf32>
    %36 = tpu.reciprocal %35 {approx = true} : vector<8x1xf32> -> vector<8x1xf32>
    %37 = arith.mulf %35, %36 : vector<8x1xf32>
    %cst_6 = arith.constant 2.000000e+00 : f32
    %38 = vector.broadcast %cst_6 : f32 to vector<8x1xf32>
    %39 = arith.subf %38, %37 : vector<8x1xf32>
    %40 = arith.mulf %36, %39 : vector<8x1xf32>
    %41 = arith.mulf %29, %40 : vector<8x1xf32>
    %42 = arith.mulf %31, %40 : vector<8x1xf32>
    %43 = arith.mulf %33, %40 : vector<8x1xf32>
    %44 = tpu.concatenate %41, %42, %43 in 1 : vector<8x1xf32>, vector<8x1xf32>, vector<8x1xf32> -> vector<8x3xf32>
    %c0_7 = arith.constant 0 : index
    %c0_8 = arith.constant 0 : index
    %45 = vector.load %arg3[%c0_7, %c0_8] : memref<8x3xf32, #tpu.memory_space<vmem>>, vector<8x3xf32>
    tpu.vector_store %arg3[%c0_7, %c0_8], %44 {strides = array<i32>} : memref<8x3xf32, #tpu.memory_space<vmem>>, vector<8x3xf32>,
    return
  }
}

</mosaic_0001>

<llo_original>
// kernel: tpu_custom_call.1
$region0: #{tpu_custom_call.1}
  #allocation0 [shape = 'u32[]', space=smem, size = 0x4, offset = 0x4, fixed_abs, tag = 'smem constant byte address 0x4 - core index']
  #allocation1 [shape = 'u32[144,128]{1,0:T(1,128)}', space=vmem, size = 0x12000, scoped, tag = 'internal scratch']
  %s0 = inlined_call_operand.hbm [shape: f32[8,32], index: 0, kind: input, shape index: {}]
  %s1 = inlined_call_operand.hbm [shape: f32[3,32], index: 1, kind: input, shape index: {}]
  %s2 = inlined_call_operand.vmem [shape: f32[3], index: 2, kind: input, shape index: {}]
  %s3 = inlined_call_operand.vmem [shape: f32[8,3], index: 3, kind: output, shape index: {}]
  %s4 = sld [smem:[#allocation0]]
  $region34: #{tpu_custom_call.1} parent=0
    _
  %s6 = ssub.s32 1, %s4
  %s7 = scalar_select 0, %s6, %s4
  $region1: #{tpu_custom_call.1} parent=0
    #allocation2 [shape = 'u8[4096]{0}', space=vmem, size = 0x1000, scoped, tag = 'input window, operand 0, single buffered']
    #allocation3 [shape = 's32[1]{0}', space=sflag, size = 0x4, scoped, tag = 'scoped memory for tpu_custom_call.1']
    #allocation4 [shape = 's32[1]{0}', space=sflag, size = 0x4, scoped, tag = 'scoped memory for tpu_custom_call.1']
    #allocation5 [shape = 'u8[2048]{0}', space=vmem, size = 0x800, scoped, tag = 'input window, operand 1, single buffered']
    #allocation6 [shape = 's32[1]{0}', space=sflag, size = 0x4, scoped, tag = 'scoped memory for tpu_custom_call.1']
    #allocation7 [shape = 'u8[512]{0}', space=smem, size = 0x200, scoped, tag = 'input window, operand 2, single buffered']
    %8 = vsyncpa [#allocation3], 0
    %9 = vsyncpa [#allocation6], 0
    %10 = vsyncpa [#allocation4], 0
    // Predicated region
    $region2: #{tpu_custom_call.1} parent=1 // pred_check
      _
    $region3: #{tpu_custom_call.1} parent=1 // pred_check_branch
      %12 = sbr.rel (0) target = $region5
    $region4: #{tpu_custom_call.1} parent=1 // pred_region
      %s14 = ssub.s32 128, 128
      %15 = vsyncadd [#allocation3], %s14
      %s17 = sshll.u32 [#allocation2], 4
      %s18 = int_to_ptr.vmem [resolvable:$true] %s17
      %20 = dma.hbm_to_vmem [thread:$0]  %s0, 128, %s18, [#allocation3]
    $region5: #{tpu_custom_call.1} parent=1 // pred_fallthru
      _
    // Predicated region
    $region6: #{tpu_custom_call.1} parent=1 // pred_check
      _
    $region7: #{tpu_custom_call.1} parent=1 // pred_check_branch
      %22 = sbr.rel (0) target = $region9
    $region8: #{tpu_custom_call.1} parent=1 // pred_region
      %s24 = ssub.s32 64, 64
      %25 = vsyncadd [#allocation6], %s24
      %s27 = sshll.u32 [#allocation5], 4
      %s28 = int_to_ptr.vmem [resolvable:$true] %s27
      %30 = dma.hbm_to_vmem [thread:$0]  %s1, 64, %s28, [#allocation6]
    $region9: #{tpu_custom_call.1} parent=1 // pred_fallthru
      _
    // Predicated region
    $region10: #{tpu_custom_call.1} parent=1 // pred_check
      _
    $region11: #{tpu_custom_call.1} parent=1 // pred_check_branch
      %32 = sbr.rel (0) target = $region13
    $region12: #{tpu_custom_call.1} parent=1 // pred_region
      %s34 = ssub.s32 16, 16
      %35 = vsyncadd [#allocation4], %s34
      %s37 = sshll.u32 %s2, 4
      %s38 = int_to_ptr.vmem [resolvable:$true] %s37
      %40 = dma.vmem_to_smem %s38, 16, [#allocation7], [#allocation4]
    $region13: #{tpu_custom_call.1} parent=1 // pred_fallthru
      _
    // Predicated region
    $region14: #{tpu_custom_call.1} parent=1 // pred_check
      _
    $region15: #{tpu_custom_call.1} parent=1 // pred_check_branch
      %42 = sbr.rel (0) target = $region17
    $region16: #{tpu_custom_call.1} parent=1 // pred_region
      %43 = dma.done [#allocation3], 128
    $region17: #{tpu_custom_call.1} parent=1 // pred_fallthru
      _
    // Predicated region
    $region18: #{tpu_custom_call.1} parent=1 // pred_check
      _
    $region19: #{tpu_custom_call.1} parent=1 // pred_check_branch
      %45 = sbr.rel (0) target = $region21
    $region20: #{tpu_custom_call.1} parent=1 // pred_region
      %46 = dma.done [#allocation6], 64
    $region21: #{tpu_custom_call.1} parent=1 // pred_fallthru
      _
    // Predicated region
    $region22: #{tpu_custom_call.1} parent=1 // pred_check
      _
    $region23: #{tpu_custom_call.1} parent=1 // pred_check_branch
      %48 = sbr.rel (0) target = $region25
    $region24: #{tpu_custom_call.1} parent=1 // pred_region
      %49 = dma.done [#allocation4], 16
    $region25: #{tpu_custom_call.1} parent=1 // pred_fallthru
      _
    %50 = sfence
    %v51 = vld [vmem:[#allocation2] sm:$0xff]
    %v52 = vld [vmem:[#allocation5] sm:$0x7]
    %v53 = vlaneseq
    %v54 = vshrl.u32 %v53, 7
    %v55 = vsub.s32 0, %v54
    %v56 = vrot.slane %v52, %v55
    %v57 = vmul.f32 %v51, %v56
    %vm58 = vcmask 261120
    %v59 = vsel %vm58, %v57, 0.0
    %60 = vadd.xlane.f32.xlu0 %v59
    %v61 = vpop.xlane.xlu0 %60
    %s62 = sld [smem:[#allocation7]]
    %v63 = vstv %s62
    %v64 = vadd.f32 %v61, %v63
    %v65 = vlaneseq
    %v66 = vshrl.u32 %v65, 7
    %v67 = vsub.s32 1, %v66
    %v68 = vrot.slane %v52, %v67
    %v69 = vmul.f32 %v51, %v68
    %v70 = vsel %vm58, %v69, 0.0
    %71 = vadd.xlane.f32.xlu0 %v70
    %v72 = vpop.xlane.xlu0 %71
    %s73 = sld [smem:[#allocation7 + $0x1]]
    %v74 = vstv %s73
    %v75 = vadd.f32 %v72, %v74
    %v76 = vlaneseq
    %v77 = vshrl.u32 %v76, 7
    %v78 = vsub.s32 2, %v77
    %v79 = vrot.slane %v52, %v78
    %v80 = vmul.f32 %v51, %v79
    %v81 = vsel %vm58, %v80, 0.0
    %82 = vadd.xlane.f32.xlu0 %v81
    %v83 = vpop.xlane.xlu0 %82
    %s84 = sld [smem:[#allocation7 + $0x2]]
    %v85 = vstv %s84
    %v86 = vadd.f32 %v83, %v85
    %v87 = vmax.f32 %v64, %v75
    %v88 = vmax.f32 %v87, %v86
    %v89 = vsub.f32 %v64, %v88
    %v90 = vmul.f32 %v89, 1.442695
    %v91 = vpow.pop %v90
    %v92 = vsub.f32 %v75, %v88
    %v93 = vmul.f32 %v92, 1.442695
    %v94 = vpow.pop %v93
    %v95 = vsub.f32 %v86, %v88
    %v96 = vmul.f32 %v95, 1.442695
    %v97 = vpow.pop %v96
    %v98 = vadd.f32 %v91, %v94
    %v99 = vadd.f32 %v98, %v97
    %v100 = vrcp.pop %v99
    %v101 = vmul.f32 %v99, %v100
    %v102 = vsub.f32 2.0, %v101
    %v103 = vmul.f32 %v100, %v102
    %v104 = vmul.f32 %v91, %v103
    %v105 = vmul.f32 %v94, %v103
    %v106 = vmul.f32 %v97, %v103
    %vm107 = vcmask 7168
    %v108 = vsel %vm107, %v104, %v105
    %vm109 = vcmask 15360
    %v110 = vsel %vm109, %v108, %v106
    %vm111 = vcmask 23552
    %112 = vst.msk [vmem:[%s3] sm:$0xff] %vm111, %v110
    // Predicated region
    $region26: #{tpu_custom_call.1} parent=1 // pred_check
      _
    $region27: #{tpu_custom_call.1} parent=1 // pred_check_branch
      %114 = sbr.rel (0) target = $region29
    $region28: #{tpu_custom_call.1} parent=1 // pred_region
      _
    $region29: #{tpu_custom_call.1} parent=1 // pred_fallthru
      _
    // Predicated region
    $region30: #{tpu_custom_call.1} parent=1 // pred_check
      _
    $region31: #{tpu_custom_call.1} parent=1 // pred_check_branch
      %116 = sbr.rel (0) target = $region33
    $region32: #{tpu_custom_call.1} parent=1 // pred_region
      _
    $region33: #{tpu_custom_call.1} parent=1 // pred_fallthru
      _
    %117 = vsyncpa [#allocation3], 1
    %118 = vsyncpa [#allocation6], 1
    %119 = vsyncpa [#allocation4], 1

</llo_original>
